<compile_context>
chip_gen: v6e
topology: v6e:2x2x1
jax: 0.10.0
libtpu: 0.0.40
codegen_flags: <defaults>
</compile_context>

<pallas_src>
import jax
import jax.numpy as jnp
from jax.experimental import pallas as pl
from jax.experimental.pallas import tpu as pltpu

_LANES = 128


def _broadcast_row_kernel(row_ref, out_ref):
    # row_ref: (1, width) VMEM block, staged once (constant block index).
    # out_ref: (tile_rows, width) VMEM output tile.
    # Pure sublane broadcast on the VPU + lane-dense store; hidden under the
    # output writeback DMA of the previous tile.
    out_ref[...] = jnp.broadcast_to(row_ref[...], out_ref.shape)


def _sublane_multiple(dtype) -> int:
    # Native sublane packing: f32 -> 8, bf16/f16 -> 16, int8/fp8 -> 32.
    itemsize = jnp.dtype(dtype).itemsize
    return 8 * max(1, 4 // itemsize)


def _choose_tile_rows(n_rows: int, width: int, itemsize: int, sublane: int,
                      *, bytes_per_buffer: int = 4 << 20,
                      min_steps: int = 4) -> int:
    """Output tile height: sublane-aligned, VMEM-bounded, multi-step grid."""
    if n_rows <= sublane:
        return n_rows  # single full-extent block (block == array dims is legal)
    # VMEM budget per (double-buffered) output tile.
    budget_rows = (bytes_per_buffer // max(1, width * itemsize)) // sublane * sublane
    budget_rows = max(sublane, budget_rows)
    # Aim for >= min_steps grid steps so v7x's two TCs both issue writebacks.
    split_rows = (n_rows + min_steps - 1) // min_steps
    split_rows = max(sublane, (split_rows + sublane - 1) // sublane * sublane)
    tile = min(n_rows, budget_rows, split_rows)
    if tile < n_rows:
        tile = max(sublane, (tile // sublane) * sublane)
    return tile


def token_type_embeddings(table: jax.Array, token_type_id: int, seq_length: int,
                          *, tile_rows: int | None = None) -> jax.Array:
    """Pallas equivalent of TokenTypeEmbeddings.forward.

    table: (token_type_num, d_model) embedding weight
    returns: (seq_length, d_model) = table[token_type_id] broadcast over seq.
    """
    token_type_num, d_model = table.shape
    tid = int(token_type_id)
    if not (0 <= tid < token_type_num):
        raise ValueError(
            f"token_type_id {tid} out of range [0, {token_type_num})")

    dtype = table.dtype
    itemsize = jnp.dtype(dtype).itemsize
    sublane = _sublane_multiple(dtype)

    # Static row selection (token_type_id is a Python int) -> free XLA slice.
    row = table[tid:tid + 1, :]                                   # (1, d_model)

    # Lane-dense repack for narrow d_model: emit a flat (n_rows, 128) slab.
    use_slab = (d_model % _LANES != 0 and _LANES % d_model == 0
                and (seq_length * d_model) % _LANES == 0)
    if use_slab:
        reps = _LANES // d_model
        pattern = jnp.tile(row, (1, reps))                        # (1, 128)
        n_rows, width = (seq_length * d_model) // _LANES, _LANES
    else:
        # TODO(synk): d_model neither a multiple nor a divisor of 128 falls
        # back to masked partial stores on the lane axis.
        pattern = row
        n_rows, width = seq_length, d_model

    if tile_rows is None:
        tile_rows = _choose_tile_rows(n_rows, width, itemsize, sublane)
    else:
        tile_rows = min(int(tile_rows), n_rows)
        if tile_rows < n_rows:  # keep user-supplied tiles sublane-aligned
            tile_rows = min(n_rows, max(sublane, (tile_rows // sublane) * sublane))
    grid = (pl.cdiv(n_rows, tile_rows),)

    cost = pl.CostEstimate(
        flops=0,
        transcendentals=0,
        bytes_accessed=n_rows * width * itemsize      # output writeback
        + width * itemsize,                           # one staged row read
    )

    out = pl.pallas_call(
        _broadcast_row_kernel,
        out_shape=jax.ShapeDtypeStruct((n_rows, width), dtype),
        grid_spec=pltpu.PrefetchScalarGridSpec(
            num_scalar_prefetch=0,
            grid=grid,
            # One-row input, constant block index -> staged once for all tiles.
            in_specs=[pl.BlockSpec((1, width), lambda i: (0, 0))],
            # seq-tiled, never sub-tiled on the lane axis.
            out_specs=pl.BlockSpec((tile_rows, width), lambda i: (i, 0)),
        ),
        compiler_params=pltpu.CompilerParams(
            dimension_semantics=("parallel",)),
        cost_estimate=cost,
    )(pattern)

    if use_slab:
        out = out.reshape(seq_length, d_model)
    return out


class TokenTypeEmbeddingsPallas:
    """Thin wrapper mirroring the PyTorch module interface."""

    def __init__(self, d_model: int, token_type_num: int):
        # nn.init.zeros_(self.modality_embedding.weight)
        self.weight = jnp.zeros((token_type_num, d_model), dtype=jnp.float32)
        self.type2id = {"question": 0, "video": 1, "object": 2}

    def __call__(self, embeddings: jax.Array, token_type: str) -> jax.Array:
        seq_length = embeddings.shape[1]
        token_type_id = self.type2id[token_type]
        return token_type_embeddings(self.weight, token_type_id, seq_length)


if __name__ == "__main__":
    key = jax.random.PRNGKey(0)
    batch, seq, d_model, token_type_num = 2, 8, 32, 3

    k_emb, k_tbl, k_tbl2, k_tbl3, k_tbl4 = jax.random.split(key, 5)
    # embeddings are only used for their seq dimension (as in the PyTorch code)
    embeddings = jax.random.normal(k_emb, (batch, seq, d_model), dtype=jnp.float32)

    # 1) Faithful module (zero-initialized weights) -> all-zeros output.
    module = TokenTypeEmbeddingsPallas(d_model, token_type_num)
    out = jax.block_until_ready(module(embeddings, "video"))
    assert out.shape == (seq, d_model)
    assert jnp.allclose(out, jnp.zeros((seq, d_model), jnp.float32))

    # 2) Nonzero table, all token types (exercises the lane-dense slab repack
    #    for d_model=32 < 128).
    table = jax.random.normal(k_tbl, (token_type_num, d_model), dtype=jnp.float32)
    for name, tid_i in {"question": 0, "video": 1, "object": 2}.items():
        got = jax.block_until_ready(token_type_embeddings(table, tid_i, seq))
        ref = jnp.broadcast_to(table[tid_i][None, :], (seq, d_model))
        assert jnp.allclose(got, ref), f"mismatch for token_type={name}"

    # 3) Multi-step grid on an already lane-dense d_model (128), user tile.
    seq2, d_model2 = 48, 128
    table2 = jax.random.normal(k_tbl2, (token_type_num, d_model2), dtype=jnp.float32)
    got2 = jax.block_until_ready(
        token_type_embeddings(table2, 2, seq2, tile_rows=16))
    ref2 = jnp.broadcast_to(table2[2][None, :], (seq2, d_model2))
    assert got2.shape == (seq2, d_model2)
    assert jnp.allclose(got2, ref2)

    # 4) Tiled slab path: seq=64, d_model=32 -> 16 slab rows, auto multi-step.
    seq3 = 64
    table3 = jax.random.normal(k_tbl3, (token_type_num, d_model), dtype=jnp.float32)
    got3 = jax.block_until_ready(token_type_embeddings(table3, 1, seq3))
    ref3 = jnp.broadcast_to(table3[1][None, :], (seq3, d_model))
    assert jnp.allclose(got3, ref3)

    # 5) bf16 table: dtype-aware (16-row) sublane tile rounding.
    seq4, d_model4 = 64, 256
    table4 = jax.random.normal(
        k_tbl4, (token_type_num, d_model4), dtype=jnp.float32).astype(jnp.bfloat16)
    got4 = jax.block_until_ready(token_type_embeddings(table4, 0, seq4))
    ref4 = jnp.broadcast_to(table4[0][None, :], (seq4, d_model4))
    assert got4.dtype == jnp.bfloat16
    assert jnp.allclose(got4.astype(jnp.float32), ref4.astype(jnp.float32))

    # 6) Out-of-range token id is rejected (matches nn.Embedding raising).
    try:
        token_type_embeddings(table, token_type_num, seq)
        raise AssertionError("expected ValueError for out-of-range token id")
    except ValueError:
        pass

    print("KERNEL_OK")
</pallas_src>

<mosaic_0001>
module attributes {stable_mosaic.version = 11 : i64} {
  func.func @_broadcast_row_kernel(%arg0: i32, %arg1: memref<1x128xf32, #tpu.memory_space<vmem>>, %arg2: memref<2x128xf32, #tpu.memory_space<vmem>>) attributes {dimension_semantics = [#tpu.dimension_semantics<parallel>], iteration_bounds = array<i64: 1>, scalar_prefetch = 0 : i64, scratch_operands = 0 : i64, tpu.core_type = #tpu.core_type<tc>, window_params = [{pipeline_mode = #tpu.pipeline_mode<synchronous>, transform_indices = @transform_0, window_bounds = array<i64: 1, 128>}, {transform_indices = @transform_1, window_bounds = array<i64: 2, 128>}]} {
    %c0 = arith.constant 0 : index
    %c0_0 = arith.constant 0 : index
    %0 = vector.load %arg1[%c0, %c0_0] : memref<1x128xf32, #tpu.memory_space<vmem>>, vector<1x128xf32>
    %1 = vector.shape_cast %0 : vector<1x128xf32> to vector<1x128xf32>
    %2 = vector.broadcast %1 : vector<1x128xf32> to vector<2x128xf32>
    %c0_1 = arith.constant 0 : index
    %c0_2 = arith.constant 0 : index
    %3 = vector.load %arg2[%c0_1, %c0_2] : memref<2x128xf32, #tpu.memory_space<vmem>>, vector<2x128xf32>
    tpu.vector_store %arg2[%c0_1, %c0_2], %2 {strides = array<i32>} : memref<2x128xf32, #tpu.memory_space<vmem>>, vector<2x128xf32>,
    return
  }
  func.func @transform_0(%arg0: i32) -> (i32, i32) {
    %c0_i32 = arith.constant 0 : i32
    %c0_i32_0 = arith.constant 0 : i32
    %c0_i32_1 = arith.constant 0 : i32
    return %c0_i32, %c0_i32_0 : i32, i32
  }
  func.func @transform_1(%arg0: i32) -> (i32, i32) {
    %c0_i32 = arith.constant 0 : i32
    %c0_i32_0 = arith.constant 0 : i32
    return %arg0, %c0_i32 : i32, i32
  }
}

</mosaic_0001>

<llo_original>
// kernel: tpu_custom_call.1
$region0: #{tpu_custom_call.1}
  #allocation0 [shape = 'u32[]', space=smem, size = 0x4, offset = 0x4, fixed_abs, tag = 'smem constant byte address 0x4 - core index']
  #allocation1 [shape = 'u32[144,128]{1,0:T(1,128)}', space=vmem, size = 0x12000, scoped, tag = 'internal scratch']
  %s0 = inlined_call_operand.hbm [shape: f32[1,128], index: 0, kind: input, shape index: {}]
  %s1 = inlined_call_operand.hbm [shape: f32[2,128], index: 1, kind: output, shape index: {}]
  %s2 = sld [smem:[#allocation0]]
  $region18: #{tpu_custom_call.1} parent=0
    _
  %s4 = ssub.s32 1, %s2
  %s5 = scalar_select 0, %s4, %s2
  $region1: #{tpu_custom_call.1} parent=0
    #allocation2 [shape = 'u8[512]{0}', space=vmem, size = 0x400, scoped, tag = 'input window, operand 0, single buffered']
    #allocation3 [shape = 's32[1]{0}', space=sflag, size = 0x4, scoped, tag = 'scoped memory for tpu_custom_call.1']
    #allocation4 [shape = 's32[1]{0}', space=sflag, size = 0x4, scoped, tag = 'scoped memory for tpu_custom_call.1']
    #allocation5 [shape = 'u8[1024]{0}', space=vmem, size = 0x400, scoped, tag = 'output window, operand 0, single buffered']
    %6 = vsyncpa [#allocation3], 0
    %7 = vsyncpa [#allocation4], 0
    // Predicated region
    $region2: #{tpu_custom_call.1} parent=1 // pred_check
      _
    $region3: #{tpu_custom_call.1} parent=1 // pred_check_branch
      %9 = sbr.rel (0) target = $region5
    $region4: #{tpu_custom_call.1} parent=1 // pred_region
      %s11 = ssub.s32 16, 16
      %12 = vsyncadd [#allocation3], %s11
      %s14 = sshll.u32 [#allocation2], 4
      %s15 = int_to_ptr.vmem [resolvable:$true] %s14
      %17 = dma.hbm_to_vmem [thread:$0]  %s0, 16, %s15, [#allocation3]
    $region5: #{tpu_custom_call.1} parent=1 // pred_fallthru
      _
    // Predicated region
    $region6: #{tpu_custom_call.1} parent=1 // pred_check
      _
    $region7: #{tpu_custom_call.1} parent=1 // pred_check_branch
      %19 = sbr.rel (0) target = $region9
    $region8: #{tpu_custom_call.1} parent=1 // pred_region
      %20 = dma.done [#allocation3], 16
    $region9: #{tpu_custom_call.1} parent=1 // pred_fallthru
      _
    %v21 = vld [vmem:[#allocation2] sm:$0x1]
    %v23 = vlaneseq
    %v24 = vshrl.u32 %v23, 7
    %v25 = vsub.s32 0, %v24
    %v26 = vrot.slane %v21, %v25
    %28 = vst [vmem:[#allocation5] sm:$0x3] %v26
    // Predicated region
    $region10: #{tpu_custom_call.1} parent=1 // pred_check
      _
    $region11: #{tpu_custom_call.1} parent=1 // pred_check_branch
      %30 = sbr.rel (0) target = $region13
    $region12: #{tpu_custom_call.1} parent=1 // pred_region
      %s32 = ssub.s32 32, 32
      %33 = vsyncadd [#allocation4], %s32
      %s35 = sshll.u32 [#allocation5], 4
      %s36 = int_to_ptr.vmem [resolvable:$true] %s35
      %38 = dma.vmem_to_hbm [thread:$0]  %s36, 32, %s1, [#allocation4]
    $region13: #{tpu_custom_call.1} parent=1 // pred_fallthru
      _
    // Predicated region
    $region14: #{tpu_custom_call.1} parent=1 // pred_check
      _
    $region15: #{tpu_custom_call.1} parent=1 // pred_check_branch
      %40 = sbr.rel (0) target = $region17
    $region16: #{tpu_custom_call.1} parent=1 // pred_region
      %41 = dma.done [#allocation4], 32
    $region17: #{tpu_custom_call.1} parent=1 // pred_fallthru
      _
    %42 = vsyncpa [#allocation3], 1
    %43 = vsyncpa [#allocation4], 1

</llo_original>
